<compile_context>
chip_gen: v7x
topology: tpu7x:2x2x1
jax: 0.10.0
libtpu: 0.0.40
codegen_flags: <defaults>
</compile_context>

<pallas_src>
import functools

import jax
import jax.numpy as jnp
from jax import lax
from jax.experimental import pallas as pl
from jax.experimental.pallas import tpu as pltpu


def _hs_loss_kernel(a_ref, b_ref, sqy_ref, invx_ref, out_ref, acc_ref, *,
                    scale, block_b):
    """Grid: (parallel_slices, steps_per_slice). Each step owns `block_b` batch rows.

    a_ref, b_ref : (block_b, Ky, Kx) f32
    sqy_ref      : (block_b, Ky, Ky) f32 (or bf16)
    invx_ref     : (block_b, Kx, Kx) f32 (or bf16)
    out_ref      : (1, 1, 1)  per-slice partial sum
    acc_ref      : (Ky, Kx) f32 VMEM scratch, persistent across the arbitrary axis
    """
    step = pl.program_id(1)

    @pl.when(step == 0)
    def _init():
        acc_ref[...] = jnp.zeros_like(acc_ref)

    def body(n, carry):
        # Fused transform: sqrtMk_y @ ((a - b) @ pinv(sqrtMk_x)); f32 MXU accum.
        diff = a_ref[n] - b_ref[n]                                   # (Ky, Kx) f32
        invx = invx_ref[n]
        sqy = sqy_ref[n]
        if invx.dtype != jnp.float32:
            invx = invx.astype(jnp.float32)
        if sqy.dtype != jnp.float32:
            sqy = sqy.astype(jnp.float32)
        t = jnp.dot(diff, invx, preferred_element_type=jnp.float32)  # (Ky, Kx)
        t = jnp.dot(sqy, t, preferred_element_type=jnp.float32)      # (Ky, Kx)
        # Pure VPU accumulation; no cross-lane reduction in the hot loop.
        acc_ref[...] += t * t
        return carry

    lax.fori_loop(0, block_b, body, 0, unroll=(block_b <= 8))

    @pl.when(step == pl.num_programs(1) - 1)
    def _finalize():
        # Single cross-lane (XLU) reduction per slice.
        total = jnp.sum(jnp.sum(acc_ref[...], axis=-1, keepdims=True),
                        axis=-2, keepdims=True)                      # (1, 1)
        out_ref[...] = jnp.reshape(total * jnp.float32(scale), (1, 1, 1))


def squared_hilbert_schmidt_loss(a, b, sqrtMk_x, sqrtMk_y, loss_weight=1.0,
                                 *, weights_dtype=jnp.float32, max_block_b=None):
    a = a.astype(jnp.float32)
    b = b.astype(jnp.float32)
    sqrtMk_x = sqrtMk_x.astype(jnp.float32)

    B, Ky, Kx = a.shape
    assert b.shape == (B, Ky, Kx)
    assert sqrtMk_y.shape == (B, Ky, Ky)
    assert sqrtMk_x.shape == (B, Kx, Kx)

    # TODO(synk): torch.linalg.pinv (SVD-based) has no Pallas equivalent; computed in XLA.
    invx = jnp.linalg.pinv(sqrtMk_x).astype(weights_dtype)
    sqy = sqrtMk_y.astype(weights_dtype)

    wbytes = jnp.dtype(weights_dtype).itemsize
    per_elem = 2 * Ky * Kx * 4 + Ky * Ky * wbytes + Kx * Kx * wbytes

    try:
        vmem_capacity = int(pltpu.get_tpu_info().vmem_capacity_bytes)
    except Exception:  # interpret mode / older runtimes
        vmem_capacity = 64 << 20
    # Fixed footprint: (Ky,Kx) accumulator + per-element f32 temporaries + slack.
    fixed = 4 * Ky * Kx * 4 + (2 << 20)
    budget = int(0.45 * vmem_capacity)
    max_bt = max(1, (budget - fixed) // (2 * per_elem))   # 2x = double buffering
    if max_block_b is not None:
        max_bt = min(max_bt, int(max_block_b))

    # Largest divisor of B that fits the budget -> no padding pass over inputs.
    bt = 1
    for d in range(min(B, max_bt), 0, -1):
        if B % d == 0:
            bt = d
            break

    num_steps = B // bt
    # Split the reduction into 2 parallel slices when possible so v7x can use
    # both TensorCores; on 1-TC chips this just serializes at negligible cost.
    num_slices = 2 if (num_steps % 2 == 0 and num_steps >= 2) else 1
    steps_per_slice = num_steps // num_slices

    vmem_need = 2 * bt * per_elem + fixed
    vmem_limit = int(min(max(2 * vmem_need, 32 << 20), int(0.75 * vmem_capacity)))
    vmem_limit = max(vmem_limit, int(vmem_need))

    flops = 2 * B * (Ky * Kx * Kx + Ky * Ky * Kx) + 3 * B * Ky * Kx
    cost = pl.CostEstimate(flops=int(flops), transcendentals=0,
                           bytes_accessed=int(B * per_elem + num_slices * 4))

    kernel = functools.partial(_hs_loss_kernel,
                               scale=float(loss_weight) / float(B),
                               block_b=bt)

    batch_block = lambda p, i: (p * steps_per_slice + i, 0, 0)

    partials = pl.pallas_call(
        kernel,
        out_shape=jax.ShapeDtypeStruct((num_slices, 1, 1), jnp.float32),
        grid_spec=pltpu.PrefetchScalarGridSpec(
            num_scalar_prefetch=0,
            grid=(num_slices, steps_per_slice),
            in_specs=[
                pl.BlockSpec((bt, Ky, Kx), batch_block),
                pl.BlockSpec((bt, Ky, Kx), batch_block),
                pl.BlockSpec((bt, Ky, Ky), batch_block),
                pl.BlockSpec((bt, Kx, Kx), batch_block),
            ],
            out_specs=pl.BlockSpec((1, 1, 1), lambda p, i: (p, 0, 0)),
            scratch_shapes=[pltpu.VMEM((Ky, Kx), jnp.float32)],
        ),
        compiler_params=pltpu.CompilerParams(
            dimension_semantics=("parallel", "arbitrary"),
            vmem_limit_bytes=vmem_limit),
        cost_estimate=cost,
    )(a, b, sqy, invx)

    return jnp.sum(partials)


def _reference_loss(a, b, sqrtMk_x, sqrtMk_y, loss_weight=1.0):
    invx = jnp.linalg.pinv(sqrtMk_x)
    a_t = jnp.matmul(sqrtMk_y, jnp.matmul(a, invx))
    b_t = jnp.matmul(sqrtMk_y, jnp.matmul(b, invx))
    diff = a_t - b_t
    loss = jnp.sum(jnp.abs(diff) ** 2, axis=(-2, -1))
    return loss_weight * jnp.mean(loss)


if __name__ == "__main__":
    B, Ky, Kx = 2, 32, 32
    key = jax.random.PRNGKey(0)
    k1, k2, k3, k4 = jax.random.split(key, 4)

    a = jax.random.normal(k1, (B, Ky, Kx), dtype=jnp.float32)
    b = jax.random.normal(k2, (B, Ky, Kx), dtype=jnp.float32)
    # Deterministic, well-conditioned "sqrt mass" matrices.
    sqrtMk_x = (jnp.eye(Kx, dtype=jnp.float32)[None]
                + 0.1 * jax.random.normal(k3, (B, Kx, Kx), dtype=jnp.float32))
    sqrtMk_y = (jnp.eye(Ky, dtype=jnp.float32)[None]
                + 0.1 * jax.random.normal(k4, (B, Ky, Ky), dtype=jnp.float32))

    loss_weight = 1.0
    ref = jax.block_until_ready(
        _reference_loss(a, b, sqrtMk_x, sqrtMk_y, loss_weight))

    # Default path: auto-sized Bt (=B here), single step.
    out = jax.block_until_ready(
        squared_hilbert_schmidt_loss(a, b, sqrtMk_x, sqrtMk_y, loss_weight))
    assert jnp.allclose(out, ref, rtol=1e-4, atol=1e-4), (out, ref)

    # Exercise the multi-step / dual-slice accumulator path (Bt=1 -> 2 slices).
    out_small = jax.block_until_ready(
        squared_hilbert_schmidt_loss(a, b, sqrtMk_x, sqrtMk_y, loss_weight,
                                     max_block_b=1))
    assert jnp.allclose(out_small, ref, rtol=1e-4, atol=1e-4), (out_small, ref)

    print("KERNEL_OK")
</pallas_src>

<mosaic_0001>
module attributes {stable_mosaic.version = 11 : i64} {
  func.func @_hs_loss_kernel(%arg0: i32, %arg1: i32, %arg2: memref<2x32x32xf32, #tpu.memory_space<vmem>>, %arg3: memref<2x32x32xf32, #tpu.memory_space<vmem>>, %arg4: memref<2x32x32xf32, #tpu.memory_space<vmem>>, %arg5: memref<2x32x32xf32, #tpu.memory_space<vmem>>, %arg6: memref<1x1x1xf32, #tpu.memory_space<vmem>>, %arg7: memref<32x32xf32, #tpu.memory_space<vmem>>) attributes {dimension_semantics = [#tpu.dimension_semantics<parallel>, #tpu.dimension_semantics<arbitrary>], iteration_bounds = array<i64: 1, 1>, scalar_prefetch = 0 : i64, scratch_operands = 1 : i64, tpu.core_type = #tpu.core_type<tc>, window_params = [{transform_indices = @transform_0, window_bounds = array<i64: 2, 32, 32>}, {transform_indices = @transform_1, window_bounds = array<i64: 2, 32, 32>}, {transform_indices = @transform_2, window_bounds = array<i64: 2, 32, 32>}, {transform_indices = @transform_3, window_bounds = array<i64: 2, 32, 32>}, {transform_indices = @transform_4, window_bounds = array<i64: 1, 1, 1>}]} {
    %c0_i32 = arith.constant 0 : i32
    %0 = arith.cmpi eq, %arg1, %c0_i32 : i32
    %1 = arith.extui %0 : i1 to i32
    %c0_i32_0 = arith.constant 0 : i32
    %2 = arith.cmpi ne, %1, %c0_i32_0 : i32
    scf.if %2 {
      %cst_30 = arith.constant 0.000000e+00 : f32
      %44 = vector.broadcast %cst_30 : f32 to vector<32x32xf32>
      %c0_31 = arith.constant 0 : index
      %c0_32 = arith.constant 0 : index
      %45 = vector.load %arg7[%c0_31, %c0_32] : memref<32x32xf32, #tpu.memory_space<vmem>>, vector<32x32xf32>
      tpu.vector_store %arg7[%c0_31, %c0_32], %44 {strides = array<i32>} : memref<32x32xf32, #tpu.memory_space<vmem>>, vector<32x32xf32>,
    } else {
    }
    %c0_i32_1 = arith.constant 0 : i32
    %3 = arith.index_cast %c0_i32_1 : i32 to index
    %c0 = arith.constant 0 : index
    %c0_2 = arith.constant 0 : index
    %4 = vector.load %arg2[%3, %c0, %c0_2] : memref<2x32x32xf32, #tpu.memory_space<vmem>>, vector<1x32x32xf32>
    %5 = vector.shape_cast %4 : vector<1x32x32xf32> to vector<32x32xf32>
    %6 = arith.index_cast %c0_i32_1 : i32 to index
    %c0_3 = arith.constant 0 : index
    %c0_4 = arith.constant 0 : index
    %7 = vector.load %arg3[%6, %c0_3, %c0_4] : memref<2x32x32xf32, #tpu.memory_space<vmem>>, vector<1x32x32xf32>
    %8 = vector.shape_cast %7 : vector<1x32x32xf32> to vector<32x32xf32>
    %9 = arith.subf %5, %8 : vector<32x32xf32>
    %10 = arith.index_cast %c0_i32_1 : i32 to index
    %c0_5 = arith.constant 0 : index
    %c0_6 = arith.constant 0 : index
    %11 = vector.load %arg5[%10, %c0_5, %c0_6] : memref<2x32x32xf32, #tpu.memory_space<vmem>>, vector<1x32x32xf32>
    %12 = vector.shape_cast %11 : vector<1x32x32xf32> to vector<32x32xf32>
    %13 = arith.index_cast %c0_i32_1 : i32 to index
    %c0_7 = arith.constant 0 : index
    %c0_8 = arith.constant 0 : index
    %14 = vector.load %arg4[%13, %c0_7, %c0_8] : memref<2x32x32xf32, #tpu.memory_space<vmem>>, vector<1x32x32xf32>
    %15 = vector.shape_cast %14 : vector<1x32x32xf32> to vector<32x32xf32>
    %cst = arith.constant dense<0.000000e+00> : vector<32x32xf32>
    %16 = tpu.matmul %9, %12, %cst {dimension_numbers = #tpu.dot_dimension_numbers<[1], [0], [0], [1], [0, 0, 1, 1], [], []>} : vector<32x32xf32>, vector<32x32xf32>, vector<32x32xf32> -> vector<32x32xf32>
    %cst_9 = arith.constant dense<0.000000e+00> : vector<32x32xf32>
    %17 = tpu.matmul %15, %16, %cst_9 {dimension_numbers = #tpu.dot_dimension_numbers<[1], [0], [0], [1], [0, 0, 1, 1], [], []>} : vector<32x32xf32>, vector<32x32xf32>, vector<32x32xf32> -> vector<32x32xf32>
    %c0_10 = arith.constant 0 : index
    %c0_11 = arith.constant 0 : index
    %18 = vector.load %arg7[%c0_10, %c0_11] : memref<32x32xf32, #tpu.memory_space<vmem>>, vector<32x32xf32>
    %19 = arith.mulf %17, %17 : vector<32x32xf32>
    %20 = arith.addf %18, %19 : vector<32x32xf32>
    %c0_12 = arith.constant 0 : index
    %c0_13 = arith.constant 0 : index
    %21 = vector.load %arg7[%c0_12, %c0_13] : memref<32x32xf32, #tpu.memory_space<vmem>>, vector<32x32xf32>
    tpu.vector_store %arg7[%c0_12, %c0_13], %20 {strides = array<i32>} : memref<32x32xf32, #tpu.memory_space<vmem>>, vector<32x32xf32>,
    %c1_i32 = arith.constant 1 : i32
    %22 = arith.index_cast %c1_i32 : i32 to index
    %c0_14 = arith.constant 0 : index
    %c0_15 = arith.constant 0 : index
    %23 = vector.load %arg2[%22, %c0_14, %c0_15] : memref<2x32x32xf32, #tpu.memory_space<vmem>>, vector<1x32x32xf32>
    %24 = vector.shape_cast %23 : vector<1x32x32xf32> to vector<32x32xf32>
    %25 = arith.index_cast %c1_i32 : i32 to index
    %c0_16 = arith.constant 0 : index
    %c0_17 = arith.constant 0 : index
    %26 = vector.load %arg3[%25, %c0_16, %c0_17] : memref<2x32x32xf32, #tpu.memory_space<vmem>>, vector<1x32x32xf32>
    %27 = vector.shape_cast %26 : vector<1x32x32xf32> to vector<32x32xf32>
    %28 = arith.subf %24, %27 : vector<32x32xf32>
    %29 = arith.index_cast %c1_i32 : i32 to index
    %c0_18 = arith.constant 0 : index
    %c0_19 = arith.constant 0 : index
    %30 = vector.load %arg5[%29, %c0_18, %c0_19] : memref<2x32x32xf32, #tpu.memory_space<vmem>>, vector<1x32x32xf32>
    %31 = vector.shape_cast %30 : vector<1x32x32xf32> to vector<32x32xf32>
    %32 = arith.index_cast %c1_i32 : i32 to index
    %c0_20 = arith.constant 0 : index
    %c0_21 = arith.constant 0 : index
    %33 = vector.load %arg4[%32, %c0_20, %c0_21] : memref<2x32x32xf32, #tpu.memory_space<vmem>>, vector<1x32x32xf32>
    %34 = vector.shape_cast %33 : vector<1x32x32xf32> to vector<32x32xf32>
    %cst_22 = arith.constant dense<0.000000e+00> : vector<32x32xf32>
    %35 = tpu.matmul %28, %31, %cst_22 {dimension_numbers = #tpu.dot_dimension_numbers<[1], [0], [0], [1], [0, 0, 1, 1], [], []>} : vector<32x32xf32>, vector<32x32xf32>, vector<32x32xf32> -> vector<32x32xf32>
    %cst_23 = arith.constant dense<0.000000e+00> : vector<32x32xf32>
    %36 = tpu.matmul %34, %35, %cst_23 {dimension_numbers = #tpu.dot_dimension_numbers<[1], [0], [0], [1], [0, 0, 1, 1], [], []>} : vector<32x32xf32>, vector<32x32xf32>, vector<32x32xf32> -> vector<32x32xf32>
    %c0_24 = arith.constant 0 : index
    %c0_25 = arith.constant 0 : index
    %37 = vector.load %arg7[%c0_24, %c0_25] : memref<32x32xf32, #tpu.memory_space<vmem>>, vector<32x32xf32>
    %38 = arith.mulf %36, %36 : vector<32x32xf32>
    %39 = arith.addf %37, %38 : vector<32x32xf32>
    %c0_26 = arith.constant 0 : index
    %c0_27 = arith.constant 0 : index
    %40 = vector.load %arg7[%c0_26, %c0_27] : memref<32x32xf32, #tpu.memory_space<vmem>>, vector<32x32xf32>
    tpu.vector_store %arg7[%c0_26, %c0_27], %39 {strides = array<i32>} : memref<32x32xf32, #tpu.memory_space<vmem>>, vector<32x32xf32>,
    %c2_i32 = arith.constant 2 : i32
    %c0_i32_28 = arith.constant 0 : i32
    %41 = arith.cmpi eq, %arg1, %c0_i32_28 : i32
    %42 = arith.extui %41 : i1 to i32
    %c0_i32_29 = arith.constant 0 : i32
    %43 = arith.cmpi ne, %42, %c0_i32_29 : i32
    scf.if %43 {
      %c0_30 = arith.constant 0 : index
      %c0_31 = arith.constant 0 : index
      %44 = vector.load %arg7[%c0_30, %c0_31] : memref<32x32xf32, #tpu.memory_space<vmem>>, vector<32x32xf32>
      %cst_32 = arith.constant dense<0.000000e+00> : vector<32xf32>
      %45 = vector.multi_reduction <add>, %44, %cst_32 [1] : vector<32x32xf32> to vector<32xf32>
      %46 = vector.shape_cast %45 : vector<32xf32> to vector<32x1xf32>
      %cst_33 = arith.constant dense<0.000000e+00> : vector<1xf32>
      %47 = vector.multi_reduction <add>, %46, %cst_33 [0] : vector<32x1xf32> to vector<1xf32>
      %48 = vector.shape_cast %47 : vector<1xf32> to vector<1x1xf32>
      %cst_34 = arith.constant 5.000000e-01 : f32
      %49 = vector.broadcast %cst_34 : f32 to vector<1x1xf32>
      %50 = arith.mulf %48, %49 : vector<1x1xf32>
      %51 = vector.shape_cast %50 : vector<1x1xf32> to vector<1x1x1xf32>
      %c0_35 = arith.constant 0 : index
      %c0_36 = arith.constant 0 : index
      %c0_37 = arith.constant 0 : index
      %52 = vector.load %arg6[%c0_35, %c0_36, %c0_37] : memref<1x1x1xf32, #tpu.memory_space<vmem>>, vector<1x1x1xf32>
      tpu.vector_store %arg6[%c0_35, %c0_36, %c0_37], %51 {strides = array<i32>} : memref<1x1x1xf32, #tpu.memory_space<vmem>>, vector<1x1x1xf32>,
    } else {
    }
    return
  }
  func.func @transform_0(%arg0: i32, %arg1: i32) -> (i32, i32, i32) {
    %c1_i32 = arith.constant 1 : i32
    %0 = arith.muli %arg0, %c1_i32 : i32
    %1 = arith.addi %0, %arg1 : i32
    %c0_i32 = arith.constant 0 : i32
    %c0_i32_0 = arith.constant 0 : i32
    %c0_i32_1 = arith.constant 0 : i32
    return %1, %c0_i32, %c0_i32_0 : i32, i32, i32
  }
  func.func @transform_1(%arg0: i32, %arg1: i32) -> (i32, i32, i32) {
    %c1_i32 = arith.constant 1 : i32
    %0 = arith.muli %arg0, %c1_i32 : i32
    %1 = arith.addi %0, %arg1 : i32
    %c0_i32 = arith.constant 0 : i32
    %c0_i32_0 = arith.constant 0 : i32
    %c0_i32_1 = arith.constant 0 : i32
    return %1, %c0_i32, %c0_i32_0 : i32, i32, i32
  }
  func.func @transform_2(%arg0: i32, %arg1: i32) -> (i32, i32, i32) {
    %c1_i32 = arith.constant 1 : i32
    %0 = arith.muli %arg0, %c1_i32 : i32
    %1 = arith.addi %0, %arg1 : i32
    %c0_i32 = arith.constant 0 : i32
    %c0_i32_0 = arith.constant 0 : i32
    %c0_i32_1 = arith.constant 0 : i32
    return %1, %c0_i32, %c0_i32_0 : i32, i32, i32
  }
  func.func @transform_3(%arg0: i32, %arg1: i32) -> (i32, i32, i32) {
    %c1_i32 = arith.constant 1 : i32
    %0 = arith.muli %arg0, %c1_i32 : i32
    %1 = arith.addi %0, %arg1 : i32
    %c0_i32 = arith.constant 0 : i32
    %c0_i32_0 = arith.constant 0 : i32
    %c0_i32_1 = arith.constant 0 : i32
    return %1, %c0_i32, %c0_i32_0 : i32, i32, i32
  }
  func.func @transform_4(%arg0: i32, %arg1: i32) -> (i32, i32, i32) {
    %c0_i32 = arith.constant 0 : i32
    %c0_i32_0 = arith.constant 0 : i32
    %c0_i32_1 = arith.constant 0 : i32
    return %arg0, %c0_i32, %c0_i32_0 : i32, i32, i32
  }
}

</mosaic_0001>

<llo_original>
// kernel: tpu_custom_call.1
$region0: #{tpu_custom_call.1}
  #allocation0 [shape = 'u32[]', space=smem, size = 0x4, offset = 0x4, fixed_abs, tag = 'smem constant byte address 0x4 - core index']
  #allocation1 [shape = 'u32[144,128]{1,0:T(1,128)}', space=vmem, size = 0x12000, scoped, tag = 'internal scratch']
  #allocation2 [shape = 'f32[32,32]{1,0:T(8,128)}', space=vmem, size = 0x4000, scoped, tag = 'scratch operand']
  %s0 = inlined_call_operand.hbm [shape: f32[2,32,32], index: 0, kind: input, shape index: {}]
  %s1 = inlined_call_operand.hbm [shape: f32[2,32,32], index: 1, kind: input, shape index: {}]
  %s2 = inlined_call_operand.hbm [shape: f32[2,32,32], index: 2, kind: input, shape index: {}]
  %s3 = inlined_call_operand.hbm [shape: f32[2,32,32], index: 3, kind: input, shape index: {}]
  %s4 = inlined_call_operand.hbm [shape: f32[1,1,1], index: 4, kind: output, shape index: {}]
  %s5 = sld [smem:[#allocation0]]
  $region50: #{tpu_custom_call.1} parent=0
    _
  %s7 = ssub.s32 1, %s5
  %s8 = scalar_select 0, %s7, %s5
  $region1: #{tpu_custom_call.1} parent=0
    #allocation3 [shape = 'u8[32768]{0}', space=vmem, size = 0x8000, scoped, tag = 'input window, operand 0, single buffered']
    #allocation4 [shape = 's32[1]{0}', space=sflag, size = 0x4, scoped, tag = 'scoped memory for tpu_custom_call.1']
    #allocation5 [shape = 's32[1]{0}', space=sflag, size = 0x4, scoped, tag = 'scoped memory for tpu_custom_call.1']
    #allocation6 [shape = 'u8[32768]{0}', space=vmem, size = 0x8000, scoped, tag = 'input window, operand 1, single buffered']
    #allocation7 [shape = 's32[1]{0}', space=sflag, size = 0x4, scoped, tag = 'scoped memory for tpu_custom_call.1']
    #allocation8 [shape = 'u8[32768]{0}', space=vmem, size = 0x8000, scoped, tag = 'input window, operand 2, single buffered']
    #allocation9 [shape = 'u8[32768]{0}', space=vmem, size = 0x8000, scoped, tag = 'input window, operand 3, single buffered']
    #allocation10 [shape = 's32[1]{0}', space=sflag, size = 0x4, scoped, tag = 'scoped memory for tpu_custom_call.1']
    #allocation11 [shape = 'u8[512]{0}', space=vmem, size = 0x400, scoped, tag = 'output window, operand 0, single buffered']
    %9 = vsyncpa [#allocation4], 0
    %10 = vsyncpa [#allocation7], 0
    %11 = vsyncpa [#allocation10], 0
    %12 = vsyncpa [#allocation5], 0
    // Predicated region
    $region2: #{tpu_custom_call.1} parent=1 // pred_check
      _
    $region3: #{tpu_custom_call.1} parent=1 // pred_check_branch
      %14 = sbr.rel (0) target = $region5
    $region4: #{tpu_custom_call.1} parent=1 // pred_region
      %s15 = sadd.s32 0, 0
      %s16 = smul.u32 2, %s15
      %s18 = ssub.s32 1024, 1024
      %19 = vsyncadd [#allocation4], %s18
      %s20 = smul.addr %s16, 4
      %s21 = smul.addr %s20, 128
      %s22 = scalar_lea.hbm %s0, %s21
      %s23 = sshll.u32 [#allocation3], 4
      %s24 = int_to_ptr.vmem [resolvable:$true] %s23
      %29 = dma.hbm_to_vmem [thread:$0]  %s22, 1024, %s24, [#allocation4], 128, 128, 8
    $region5: #{tpu_custom_call.1} parent=1 // pred_fallthru
      _
    // Predicated region
    $region6: #{tpu_custom_call.1} parent=1 // pred_check
      _
    $region7: #{tpu_custom_call.1} parent=1 // pred_check_branch
      %31 = sbr.rel (0) target = $region9
    $region8: #{tpu_custom_call.1} parent=1 // pred_region
      %s32 = sadd.s32 0, 0
      %s33 = smul.u32 2, %s32
      %s35 = ssub.s32 1024, 1024
      %36 = vsyncadd [#allocation7], %s35
      %s37 = smul.addr %s33, 4
      %s38 = smul.addr %s37, 128
      %s39 = scalar_lea.hbm %s1, %s38
      %s40 = sshll.u32 [#allocation6], 4
      %s41 = int_to_ptr.vmem [resolvable:$true] %s40
      %46 = dma.hbm_to_vmem [thread:$0]  %s39, 1024, %s41, [#allocation7], 128, 128, 8
    $region9: #{tpu_custom_call.1} parent=1 // pred_fallthru
      _
    // Predicated region
    $region10: #{tpu_custom_call.1} parent=1 // pred_check
      _
    $region11: #{tpu_custom_call.1} parent=1 // pred_check_branch
      %48 = sbr.rel (0) target = $region13
    $region12: #{tpu_custom_call.1} parent=1 // pred_region
      %s49 = sadd.s32 0, 0
      %s50 = smul.u32 2, %s49
      %s52 = ssub.s32 1024, 1024
      %53 = vsyncadd [#allocation7], %s52
      %s54 = smul.addr %s50, 4
      %s55 = smul.addr %s54, 128
      %s56 = scalar_lea.hbm %s2, %s55
      %s57 = sshll.u32 [#allocation8], 4
      %s58 = int_to_ptr.vmem [resolvable:$true] %s57
      %63 = dma.hbm_to_vmem [thread:$0]  %s56, 1024, %s58, [#allocation7], 128, 128, 8
    $region13: #{tpu_custom_call.1} parent=1 // pred_fallthru
      _
    // Predicated region
    $region14: #{tpu_custom_call.1} parent=1 // pred_check
      _
    $region15: #{tpu_custom_call.1} parent=1 // pred_check_branch
      %65 = sbr.rel (0) target = $region17
    $region16: #{tpu_custom_call.1} parent=1 // pred_region
      %s66 = sadd.s32 0, 0
      %s67 = smul.u32 2, %s66
      %s69 = ssub.s32 1024, 1024
      %70 = vsyncadd [#allocation10], %s69
      %s71 = smul.addr %s67, 4
      %s72 = smul.addr %s71, 128
      %s73 = scalar_lea.hbm %s3, %s72
      %s74 = sshll.u32 [#allocation9], 4
      %s75 = int_to_ptr.vmem [resolvable:$true] %s74
      %80 = dma.hbm_to_vmem [thread:$0]  %s73, 1024, %s75, [#allocation10], 128, 128, 8
    $region17: #{tpu_custom_call.1} parent=1 // pred_fallthru
      _
    // Predicated region
    $region18: #{tpu_custom_call.1} parent=1 // pred_check
      _
    $region19: #{tpu_custom_call.1} parent=1 // pred_check_branch
      %82 = sbr.rel (0) target = $region21
    $region20: #{tpu_custom_call.1} parent=1 // pred_region
      %83 = dma.done [#allocation4], 1024
    $region21: #{tpu_custom_call.1} parent=1 // pred_fallthru
      _
    // Predicated region
    $region22: #{tpu_custom_call.1} parent=1 // pred_check
      _
    $region23: #{tpu_custom_call.1} parent=1 // pred_check_branch
      %85 = sbr.rel (0) target = $region25
    $region24: #{tpu_custom_call.1} parent=1 // pred_region
      %86 = dma.done [#allocation7], 1024
    $region25: #{tpu_custom_call.1} parent=1 // pred_fallthru
      _
    // Predicated region
    $region26: #{tpu_custom_call.1} parent=1 // pred_check
      _
    $region27: #{tpu_custom_call.1} parent=1 // pred_check_branch
      %88 = sbr.rel (0) target = $region29
    $region28: #{tpu_custom_call.1} parent=1 // pred_region
      %89 = dma.done [#allocation7], 1024
    $region29: #{tpu_custom_call.1} parent=1 // pred_fallthru
      _
    // Predicated region
    $region30: #{tpu_custom_call.1} parent=1 // pred_check
      _
    $region31: #{tpu_custom_call.1} parent=1 // pred_check_branch
      %91 = sbr.rel (0) target = $region33
    $region32: #{tpu_custom_call.1} parent=1 // pred_region
      %92 = dma.done [#allocation10], 1024
    $region33: #{tpu_custom_call.1} parent=1 // pred_fallthru
      _
    %s93 = sadd.s32 0, 0
    %s94 = smul.u32 2, %s93
    %s95 = sadd.s32 0, 0
    %s96 = smul.u32 2, %s95
    %s97 = sadd.s32 0, 0
    %s98 = smul.u32 2, %s97
    %s99 = sadd.s32 0, 0
    %s100 = smul.u32 2, %s99
    %p101 = scmp.eq.s32.totalorder 0, 0
    // Predicated region
    $region34: #{tpu_custom_call.1} parent=1 // pred_check
      %p102 = pneg %p101
    $region35: #{tpu_custom_call.1} parent=1 // pred_check_branch
      %104 = sbr.rel (%p102) target = $region37
    $region36: #{tpu_custom_call.1} parent=1 // pred_region
      %vm105 = vcmask 261120
      %106 = vst.msk [vmem:[#allocation2] sm:$0xff] %vm105, 0.0
      %107 = vst.msk [vmem:[#allocation2 + $0x8] sm:$0xff] %vm105, 0.0
      %108 = vst.msk [vmem:[#allocation2 + $0x10] sm:$0xff] %vm105, 0.0
      %109 = vst.msk [vmem:[#allocation2 + $0x18] sm:$0xff] %vm105, 0.0
    $region37: #{tpu_custom_call.1} parent=1 // pred_fallthru
      _
    %v110 = vld [vmem:[#allocation3] sm:$0xff]
    %v111 = vld [vmem:[#allocation3 + $0x8] sm:$0xff]
    %v112 = vld [vmem:[#allocation3 + $0x10] sm:$0xff]
    %v113 = vld [vmem:[#allocation3 + $0x18] sm:$0xff]
    %v114 = vld [vmem:[#allocation6] sm:$0xff]
    %v115 = vld [vmem:[#allocation6 + $0x8] sm:$0xff]
    %v116 = vld [vmem:[#allocation6 + $0x10] sm:$0xff]
    %v117 = vld [vmem:[#allocation6 + $0x18] sm:$0xff]
    %v118 = vsub.f32 %v110, %v114
    %v119 = vsub.f32 %v111, %v115
    %v120 = vsub.f32 %v112, %v116
    %v121 = vsub.f32 %v113, %v117
    %v122 = vld [vmem:[#allocation9] sm:$0xff]
    %v123 = vld [vmem:[#allocation9 + $0x8] sm:$0xff]
    %v124 = vld [vmem:[#allocation9 + $0x10] sm:$0xff]
    %v125 = vld [vmem:[#allocation9 + $0x18] sm:$0xff]
    %v126 = vld [vmem:[#allocation8] sm:$0xff]
    %v127 = vld [vmem:[#allocation8 + $0x8] sm:$0xff]
    %v128 = vld [vmem:[#allocation8 + $0x10] sm:$0xff]
    %v129 = vld [vmem:[#allocation8 + $0x18] sm:$0xff]
    %vm130 = vcmask 261120
    %v132 = vsel %vm130, %v118, 0
    %v135 = vsel %vm130, %v119, 0
    %v138 = vsel %vm130, %v120, 0
    %v141 = vsel %vm130, %v121, 0
    %143 = vmatprep.subr.mxu0 0.0
    %144 = vmatpush1.msra.mxu0 %v122
    %145 = vmatprep.subr.mxu0 0.0
    %146 = vmatpush1.msra.mxu0 %v123
    %147 = vmatprep.subr.mxu0 0.0
    %148 = vmatpush1.msra.mxu0 %v124
    %149 = vmatprep.subr.mxu0 0.0
    %150 = vmatpush1.msra.mxu0 %v125
    %151 = vmatprep.subr.mxu0 0.0
    %152 = vmatpush1.msra.mxu0 0.0
    %153 = vmatprep.subr.mxu0 0.0
    %154 = vmatpush1.msra.mxu0 0.0
    %155 = vmatprep.subr.mxu0 0.0
    %156 = vmatpush1.msra.mxu0 0.0
    %157 = vmatprep.subr.mxu0 0.0
    %158 = vmatpush1.msra.mxu0 0.0
    %159 = vmatprep.subr.mxu0 0.0
    %160 = vmatpush1.msra.mxu0 0.0
    %161 = vmatprep.subr.mxu0 0.0
    %162 = vmatpush1.msra.mxu0 0.0
    %163 = vmatprep.subr.mxu0 0.0
    %164 = vmatpush1.msra.mxu0 0.0
    %165 = vmatprep.subr.mxu0 0.0
    %166 = vmatpush1.msra.mxu0 0.0
    %167 = vmatprep.subr.mxu0 0.0
    %168 = vmatpush1.msra.mxu0 0.0
    %169 = vmatprep.subr.mxu0 0.0
    %170 = vmatpush1.msra.mxu0 0.0
    %171 = vmatprep.subr.mxu0 0.0
    %172 = vmatpush1.msra.mxu0 0.0
    %173 = vmatprep.subr.mxu0 0.0
    %174 = vmatpush1.msra.mxu0 0.0
    %175 = vmatprep.subr.mxu0 0.0
    %176 = vmatpush1.msra.mxu0 0.0
    %177 = vmatprep.subr.mxu0 0.0
    %178 = vmatpush1.msra.mxu0 0.0
    %179 = vmatprep.subr.mxu0 0.0
    %180 = vmatpush1.msra.mxu0 0.0
    %181 = vmatprep.subr.mxu0 0.0
    %182 = vmatpush1.msra.mxu0 0.0
    %183 = vmatprep.subr.mxu0 0.0
    %184 = vmatpush1.msra.mxu0 0.0
    %185 = vmatprep.subr.mxu0 0.0
    %186 = vmatpush1.msra.mxu0 0.0
    %187 = vmatprep.subr.mxu0 0.0
    %188 = vmatpush1.msra.mxu0 0.0
    %189 = vmatprep.subr.mxu0 0.0
    %190 = vmatpush1.msra.mxu0 0.0
    %191 = vmatprep.subr.mxu0 0.0
    %192 = vmatpush1.msra.mxu0 0.0
    %193 = vmatprep.subr.mxu0 0.0
    %194 = vmatpush1.msra.mxu0 0.0
    %195 = vmatprep.subr.mxu0 0.0
    %196 = vmatpush1.msra.mxu0 0.0
    %197 = vmatprep.subr.mxu0 0.0
    %198 = vmatpush1.msra.mxu0 0.0
    %199 = vmatprep.subr.mxu0 0.0
    %200 = vmatpush1.msra.mxu0 0.0
    %201 = vmatprep.subr.mxu0 0.0
    %202 = vmatpush1.msra.mxu0 0.0
    %203 = vmatprep.subr.mxu0 0.0
    %204 = vmatpush1.msra.mxu0 0.0
    %205 = vmatprep.subr.mxu0 0.0
    %206 = vmatpush1.msra.mxu0 0.0
    %207 = vmatprep.mubr.f32.mxu0 0.0
    %208 = vmatmul.mubr.f32.gmra.mrb[0].mxu0 %v132
    %v209 = vpop.f32.mrb[0].mxu0
    %v210 = vadd.f32 0.0, %v209
    %v211 = vpop.f32.mrb[0].mxu0
    %212 = vmatprep.mubr.f32.mxu0 0.0
    %213 = vmatmul.mubr.f32.gmra.mrb[0].mxu0 %v135
    %v214 = vpop.f32.mrb[0].mxu0
    %v215 = vadd.f32 0.0, %v214
    %v216 = vpop.f32.mrb[0].mxu0
    %217 = vmatprep.mubr.f32.mxu0 0.0
    %218 = vmatmul.mubr.f32.gmra.mrb[0].mxu0 %v138
    %v219 = vpop.f32.mrb[0].mxu0
    %v220 = vadd.f32 0.0, %v219
    %v221 = vpop.f32.mrb[0].mxu0
    %222 = vmatprep.mubr.f32.mxu0 0.0
    %223 = vmatmul.mubr.f32.gmra.mrb[0].mxu0 %v141
    %v224 = vpop.f32.mrb[0].mxu0
    %v225 = vadd.f32 0.0, %v224
    %v226 = vpop.f32.mrb[0].mxu0
    %227 = vdwg.mxu0
    %v229 = vsel %vm130, %v126, 0
    %v232 = vsel %vm130, %v127, 0
    %v235 = vsel %vm130, %v128, 0
    %v238 = vsel %vm130, %v129, 0
    %240 = vmatprep.subr.mxu0 0.0
    %241 = vmatpush1.msra.mxu0 %v210
    %242 = vmatprep.subr.mxu0 0.0
    %243 = vmatpush1.msra.mxu0 %v215
    %244 = vmatprep.subr.mxu0 0.0
    %245 = vmatpush1.msra.mxu0 %v220
    %246 = vmatprep.subr.mxu0 0.0
    %247 = vmatpush1.msra.mxu0 %v225
    %248 = vmatprep.subr.mxu0 0.0
    %249 = vmatpush1.msra.mxu0 0.0
    %250 = vmatprep.subr.mxu0 0.0
    %251 = vmatpush1.msra.mxu0 0.0
    %252 = vmatprep.subr.mxu0 0.0
    %253 = vmatpush1.msra.mxu0 0.0
    %254 = vmatprep.subr.mxu0 0.0
    %255 = vmatpush1.msra.mxu0 0.0
    %256 = vmatprep.subr.mxu0 0.0
    %257 = vmatpush1.msra.mxu0 0.0
    %258 = vmatprep.subr.mxu0 0.0
    %259 = vmatpush1.msra.mxu0 0.0
    %260 = vmatprep.subr.mxu0 0.0
    %261 = vmatpush1.msra.mxu0 0.0
    %262 = vmatprep.subr.mxu0 0.0
    %263 = vmatpush1.msra.mxu0 0.0
    %264 = vmatprep.subr.mxu0 0.0
    %265 = vmatpush1.msra.mxu0 0.0
    %266 = vmatprep.subr.mxu0 0.0
    %267 = vmatpush1.msra.mxu0 0.0
    %268 = vmatprep.subr.mxu0 0.0
    %269 = vmatpush1.msra.mxu0 0.0
    %270 = vmatprep.subr.mxu0 0.0
    %271 = vmatpush1.msra.mxu0 0.0
    %272 = vmatprep.subr.mxu0 0.0
    %273 = vmatpush1.msra.mxu0 0.0
    %274 = vmatprep.subr.mxu0 0.0
    %275 = vmatpush1.msra.mxu0 0.0
    %276 = vmatprep.subr.mxu0 0.0
    %277 = vmatpush1.msra.mxu0 0.0
    %278 = vmatprep.subr.mxu0 0.0
    %279 = vmatpush1.msra.mxu0 0.0
    %280 = vmatprep.subr.mxu0 0.0
    %281 = vmatpush1.msra.mxu0 0.0
    %282 = vmatprep.subr.mxu0 0.0
    %283 = vmatpush1.msra.mxu0 0.0
    %284 = vmatprep.subr.mxu0 0.0
    %285 = vmatpush1.msra.mxu0 0.0
    %286 = vmatprep.subr.mxu0 0.0
    %287 = vmatpush1.msra.mxu0 0.0
    %288 = vmatprep.subr.mxu0 0.0
    %289 = vmatpush1.msra.mxu0 0.0
    %290 = vmatprep.subr.mxu0 0.0
    %291 = vmatpush1.msra.mxu0 0.0
    %292 = vmatprep.subr.mxu0 0.0
    %293 = vmatpush1.msra.mxu0 0.0
    %294 = vmatprep.subr.mxu0 0.0
    %295 = vmatpush1.msra.mxu0 0.0
    %296 = vmatprep.subr.mxu0 0.0
    %297 = vmatpush1.msra.mxu0 0.0
    %298 = vmatprep.subr.mxu0 0.0
    %299 = vmatpush1.msra.mxu0 0.0
    %300 = vmatprep.subr.mxu0 0.0
    %301 = vmatpush1.msra.mxu0 0.0
    %302 = vmatprep.subr.mxu0 0.0
    %303 = vmatpush1.msra.mxu0 0.0
    %304 = vmatprep.mubr.f32.mxu0 0.0
    %305 = vmatmul.mubr.f32.gmra.mrb[0].mxu0 %v229
    %v306 = vpop.f32.mrb[0].mxu0
    %v307 = vadd.f32 0.0, %v306
    %v308 = vpop.f32.mrb[0].mxu0
    %309 = vmatprep.mubr.f32.mxu0 0.0
    %310 = vmatmul.mubr.f32.gmra.mrb[0].mxu0 %v232
    %v311 = vpop.f32.mrb[0].mxu0
    %v312 = vadd.f32 0.0, %v311
    %v313 = vpop.f32.mrb[0].mxu0
    %314 = vmatprep.mubr.f32.mxu0 0.0
    %315 = vmatmul.mubr.f32.gmra.mrb[0].mxu0 %v235
    %v316 = vpop.f32.mrb[0].mxu0
    %v317 = vadd.f32 0.0, %v316
    %v318 = vpop.f32.mrb[0].mxu0
    %319 = vmatprep.mubr.f32.mxu0 0.0
    %320 = vmatmul.mubr.f32.gmra.mrb[0].mxu0 %v238
    %v321 = vpop.f32.mrb[0].mxu0
    %v322 = vadd.f32 0.0, %v321
    %v323 = vpop.f32.mrb[0].mxu0
    %324 = vdwg.mxu0
    %v325 = vld [vmem:[#allocation2] sm:$0xff]
    %v326 = vld [vmem:[#allocation2 + $0x8] sm:$0xff]
    %v327 = vld [vmem:[#allocation2 + $0x10] sm:$0xff]
    %v328 = vld [vmem:[#allocation2 + $0x18] sm:$0xff]
    %v329 = vmul.f32 %v307, %v307
    %v330 = vmul.f32 %v312, %v312
    %v331 = vmul.f32 %v317, %v317
    %v332 = vmul.f32 %v322, %v322
    %v333 = vadd.f32 %v325, %v329
    %v334 = vadd.f32 %v326, %v330
    %v335 = vadd.f32 %v327, %v331
    %v336 = vadd.f32 %v328, %v332
    %337 = vst.msk [vmem:[#allocation2] sm:$0xff] %vm130, %v333
    %338 = vst.msk [vmem:[#allocation2 + $0x8] sm:$0xff] %vm130, %v334
    %339 = vst.msk [vmem:[#allocation2 + $0x10] sm:$0xff] %vm130, %v335
    %340 = vst.msk [vmem:[#allocation2 + $0x18] sm:$0xff] %vm130, %v336
    %s341 = scalar_lea.vmem [#allocation3], 32
    %v342 = vld [vmem:[%s341] sm:$0xff]
    %v343 = vld [vmem:[%s341 + $0x8] sm:$0xff]
    %v344 = vld [vmem:[%s341 + $0x10] sm:$0xff]
    %v345 = vld [vmem:[%s341 + $0x18] sm:$0xff]
    %s346 = scalar_lea.vmem [#allocation6], 32
    %v347 = vld [vmem:[%s346] sm:$0xff]
    %v348 = vld [vmem:[%s346 + $0x8] sm:$0xff]
    %v349 = vld [vmem:[%s346 + $0x10] sm:$0xff]
    %v350 = vld [vmem:[%s346 + $0x18] sm:$0xff]
    %v351 = vsub.f32 %v342, %v347
    %v352 = vsub.f32 %v343, %v348
    %v353 = vsub.f32 %v344, %v349
    %v354 = vsub.f32 %v345, %v350
    %s355 = scalar_lea.vmem [#allocation9], 32
    %v356 = vld [vmem:[%s355] sm:$0xff]
    %v357 = vld [vmem:[%s355 + $0x8] sm:$0xff]
    %v358 = vld [vmem:[%s355 + $0x10] sm:$0xff]
    %v359 = vld [vmem:[%s355 + $0x18] sm:$0xff]
    %s360 = scalar_lea.vmem [#allocation8], 32
    %v361 = vld [vmem:[%s360] sm:$0xff]
    %v362 = vld [vmem:[%s360 + $0x8] sm:$0xff]
    %v363 = vld [vmem:[%s360 + $0x10] sm:$0xff]
    %v364 = vld [vmem:[%s360 + $0x18] sm:$0xff]
    %v366 = vsel %vm130, %v351, 0
    %v369 = vsel %vm130, %v352, 0
    %v372 = vsel %vm130, %v353, 0
    %v375 = vsel %vm130, %v354, 0
    %377 = vmatprep.subr.mxu0 0.0
    %378 = vmatpush1.msra.mxu0 %v356
    %379 = vmatprep.subr.mxu0 0.0
    %380 = vmatpush1.msra.mxu0 %v357
    %381 = vmatprep.subr.mxu0 0.0
    %382 = vmatpush1.msra.mxu0 %v358
    %383 = vmatprep.subr.mxu0 0.0
    %384 = vmatpush1.msra.mxu0 %v359
    %385 = vmatprep.subr.mxu0 0.0
    %386 = vmatpush1.msra.mxu0 0.0
    %387 = vmatprep.subr.mxu0 0.0
    %388 = vmatpush1.msra.mxu0 0.0
    %389 = vmatprep.subr.mxu0 0.0
    %390 = vmatpush1.msra.mxu0 0.0
    %391 = vmatprep.subr.mxu0 0.0
    %392 = vmatpush1.msra.mxu0 0.0
    %393 = vmatprep.subr.mxu0 0.0
    %394 = vmatpush1.msra.mxu0 0.0
    %395 = vmatprep.subr.mxu0 0.0
    %396 = vmatpush1.msra.mxu0 0.0
    %397 = vmatprep.subr.mxu0 0.0
    %398 = vmatpush1.msra.mxu0 0.0
    %399 = vmatprep.subr.mxu0 0.0
    %400 = vmatpush1.msra.mxu0 0.0
    %401 = vmatprep.subr.mxu0 0.0
    %402 = vmatpush1.msra.mxu0 0.0
    %403 = vmatprep.subr.mxu0 0.0
    %404 = vmatpush1.msra.mxu0 0.0
    %405 = vmatprep.subr.mxu0 0.0
    %406 = vmatpush1.msra.mxu0 0.0
    %407 = vmatprep.subr.mxu0 0.0
    %408 = vmatpush1.msra.mxu0 0.0
    %409 = vmatprep.subr.mxu0 0.0
    %410 = vmatpush1.msra.mxu0 0.0
    %411 = vmatprep.subr.mxu0 0.0
    %412 = vmatpush1.msra.mxu0 0.0
    %413 = vmatprep.subr.mxu0 0.0
    %414 = vmatpush1.msra.mxu0 0.0
    %415 = vmatprep.subr.mxu0 0.0
    %416 = vmatpush1.msra.mxu0 0.0
    %417 = vmatprep.subr.mxu0 0.0
    %418 = vmatpush1.msra.mxu0 0.0
    %419 = vmatprep.subr.mxu0 0.0
    %420 = vmatpush1.msra.mxu0 0.0
    %421 = vmatprep.subr.mxu0 0.0
    %422 = vmatpush1.msra.mxu0 0.0
    %423 = vmatprep.subr.mxu0 0.0
    %424 = vmatpush1.msra.mxu0 0.0
    %425 = vmatprep.subr.mxu0 0.0
    %426 = vmatpush1.msra.mxu0 0.0
    %427 = vmatprep.subr.mxu0 0.0
    %428 = vmatpush1.msra.mxu0 0.0
    %429 = vmatprep.subr.mxu0 0.0
    %430 = vmatpush1.msra.mxu0 0.0
    %431 = vmatprep.subr.mxu0 0.0
    %432 = vmatpush1.msra.mxu0 0.0
    %433 = vmatprep.subr.mxu0 0.0
    %434 = vmatpush1.msra.mxu0 0.0
    %435 = vmatprep.subr.mxu0 0.0
    %436 = vmatpush1.msra.mxu0 0.0
    %437 = vmatprep.subr.mxu0 0.0
    %438 = vmatpush1.msra.mxu0 0.0
    %439 = vmatprep.subr.mxu0 0.0
    %440 = vmatpush1.msra.mxu0 0.0
    %441 = vmatprep.mubr.f32.mxu0 0.0
    %442 = vmatmul.mubr.f32.gmra.mrb[0].mxu0 %v366
    %v443 = vpop.f32.mrb[0].mxu0
    %v444 = vadd.f32 0.0, %v443
    %v445 = vpop.f32.mrb[0].mxu0
    %446 = vmatprep.mubr.f32.mxu0 0.0
    %447 = vmatmul.mubr.f32.gmra.mrb[0].mxu0 %v369
    %v448 = vpop.f32.mrb[0].mxu0
    %v449 = vadd.f32 0.0, %v448
    %v450 = vpop.f32.mrb[0].mxu0
    %451 = vmatprep.mubr.f32.mxu0 0.0
    %452 = vmatmul.mubr.f32.gmra.mrb[0].mxu0 %v372
    %v453 = vpop.f32.mrb[0].mxu0
    %v454 = vadd.f32 0.0, %v453
    %v455 = vpop.f32.mrb[0].mxu0
    %456 = vmatprep.mubr.f32.mxu0 0.0
    %457 = vmatmul.mubr.f32.gmra.mrb[0].mxu0 %v375
    %v458 = vpop.f32.mrb[0].mxu0
    %v459 = vadd.f32 0.0, %v458
    %v460 = vpop.f32.mrb[0].mxu0
    %461 = vdwg.mxu0
    %v463 = vsel %vm130, %v361, 0
    %v466 = vsel %vm130, %v362, 0
    %v469 = vsel %vm130, %v363, 0
    %v472 = vsel %vm130, %v364, 0
    %474 = vmatprep.subr.mxu0 0.0
    %475 = vmatpush1.msra.mxu0 %v444
    %476 = vmatprep.subr.mxu0 0.0
    %477 = vmatpush1.msra.mxu0 %v449
    %478 = vmatprep.subr.mxu0 0.0
    %479 = vmatpush1.msra.mxu0 %v454
    %480 = vmatprep.subr.mxu0 0.0
    %481 = vmatpush1.msra.mxu0 %v459
    %482 = vmatprep.subr.mxu0 0.0
    %483 = vmatpush1.msra.mxu0 0.0
    %484 = vmatprep.subr.mxu0 0.0
    %485 = vmatpush1.msra.mxu0 0.0
    %486 = vmatprep.subr.mxu0 0.0
    %487 = vmatpush1.msra.mxu0 0.0
    %488 = vmatprep.subr.mxu0 0.0
    %489 = vmatpush1.msra.mxu0 0.0
    %490 = vmatprep.subr.mxu0 0.0
    %491 = vmatpush1.msra.mxu0 0.0
    %492 = vmatprep.subr.mxu0 0.0
    %493 = vmatpush1.msra.mxu0 0.0
    %494 = vmatprep.subr.mxu0 0.0
    %495 = vmatpush1.msra.mxu0 0.0
    %496 = vmatprep.subr.mxu0 0.0
    %497 = vmatpush1.msra.mxu0 0.0
    %498 = vmatprep.subr.mxu0 0.0
    %499 = vmatpush1.msra.mxu0 0.0
    %500 = vmatprep.subr.mxu0 0.0
    %501 = vmatpush1.msra.mxu0 0.0
    %502 = vmatprep.subr.mxu0 0.0
    %503 = vmatpush1.msra.mxu0 0.0
    %504 = vmatprep.subr.mxu0 0.0
    %505 = vmatpush1.msra.mxu0 0.0
    %506 = vmatprep.subr.mxu0 0.0
    %507 = vmatpush1.msra.mxu0 0.0
    %508 = vmatprep.subr.mxu0 0.0
    %509 = vmatpush1.msra.mxu0 0.0
    %510 = vmatprep.subr.mxu0 0.0
    %511 = vmatpush1.msra.mxu0 0.0
    %512 = vmatprep.subr.mxu0 0.0
    %513 = vmatpush1.msra.mxu0 0.0
    %514 = vmatprep.subr.mxu0 0.0
    %515 = vmatpush1.msra.mxu0 0.0
    %516 = vmatprep.subr.mxu0 0.0
    %517 = vmatpush1.msra.mxu0 0.0
    %518 = vmatprep.subr.mxu0 0.0
    %519 = vmatpush1.msra.mxu0 0.0
    %520 = vmatprep.subr.mxu0 0.0
    %521 = vmatpush1.msra.mxu0 0.0
    %522 = vmatprep.subr.mxu0 0.0
    %523 = vmatpush1.msra.mxu0 0.0
    %524 = vmatprep.subr.mxu0 0.0
    %525 = vmatpush1.msra.mxu0 0.0
    %526 = vmatprep.subr.mxu0 0.0
    %527 = vmatpush1.msra.mxu0 0.0
    %528 = vmatprep.subr.mxu0 0.0
    %529 = vmatpush1.msra.mxu0 0.0
    %530 = vmatprep.subr.mxu0 0.0
    %531 = vmatpush1.msra.mxu0 0.0
    %532 = vmatprep.subr.mxu0 0.0
    %533 = vmatpush1.msra.mxu0 0.0
    %534 = vmatprep.subr.mxu0 0.0
    %535 = vmatpush1.msra.mxu0 0.0
    %536 = vmatprep.subr.mxu0 0.0
    %537 = vmatpush1.msra.mxu0 0.0
    %538 = vmatprep.mubr.f32.mxu0 0.0
    %539 = vmatmul.mubr.f32.gmra.mrb[0].mxu0 %v463
    %v540 = vpop.f32.mrb[0].mxu0
    %v541 = vadd.f32 0.0, %v540
    %v542 = vpop.f32.mrb[0].mxu0
    %543 = vmatprep.mubr.f32.mxu0 0.0
    %544 = vmatmul.mubr.f32.gmra.mrb[0].mxu0 %v466
    %v545 = vpop.f32.mrb[0].mxu0
    %v546 = vadd.f32 0.0, %v545
    %v547 = vpop.f32.mrb[0].mxu0
    %548 = vmatprep.mubr.f32.mxu0 0.0
    %549 = vmatmul.mubr.f32.gmra.mrb[0].mxu0 %v469
    %v550 = vpop.f32.mrb[0].mxu0
    %v551 = vadd.f32 0.0, %v550
    %v552 = vpop.f32.mrb[0].mxu0
    %553 = vmatprep.mubr.f32.mxu0 0.0
    %554 = vmatmul.mubr.f32.gmra.mrb[0].mxu0 %v472
    %v555 = vpop.f32.mrb[0].mxu0
    %v556 = vadd.f32 0.0, %v555
    %v557 = vpop.f32.mrb[0].mxu0
    %558 = vdwg.mxu0
    %v559 = vld [vmem:[#allocation2] sm:$0xff]
    %v560 = vld [vmem:[#allocation2 + $0x8] sm:$0xff]
    %v561 = vld [vmem:[#allocation2 + $0x10] sm:$0xff]
    %v562 = vld [vmem:[#allocation2 + $0x18] sm:$0xff]
    %v563 = vmul.f32 %v541, %v541
    %v564 = vmul.f32 %v546, %v546
    %v565 = vmul.f32 %v551, %v551
    %v566 = vmul.f32 %v556, %v556
    %v567 = vadd.f32 %v559, %v563
    %v568 = vadd.f32 %v560, %v564
    %v569 = vadd.f32 %v561, %v565
    %v570 = vadd.f32 %v562, %v566
    %571 = vst.msk [vmem:[#allocation2] sm:$0xff] %vm130, %v567
    %572 = vst.msk [vmem:[#allocation2 + $0x8] sm:$0xff] %vm130, %v568
    %573 = vst.msk [vmem:[#allocation2 + $0x10] sm:$0xff] %vm130, %v569
    %574 = vst.msk [vmem:[#allocation2 + $0x18] sm:$0xff] %vm130, %v570
    // Predicated region
    $region38: #{tpu_custom_call.1} parent=1 // pred_check
      %p575 = pneg %p101
    $region39: #{tpu_custom_call.1} parent=1 // pred_check_branch
      %577 = sbr.rel (%p575) target = $region41
    $region40: #{tpu_custom_call.1} parent=1 // pred_region
      %v578 = vld [vmem:[#allocation2] sm:$0xff]
      %v579 = vld [vmem:[#allocation2 + $0x8] sm:$0xff]
      %v580 = vld [vmem:[#allocation2 + $0x10] sm:$0xff]
      %v581 = vld [vmem:[#allocation2 + $0x18] sm:$0xff]
      %v582 = vsel %vm130, %v578, 0.0
      %583 = vadd.xlane.f32.xlu0 %v582
      %v584 = vpop.xlane.xlu0 %583
      %v585 = vsel %vm130, %v579, 0.0
      %586 = vadd.xlane.f32.xlu0 %v585
      %v587 = vpop.xlane.xlu0 %586
      %v588 = vsel %vm130, %v580, 0.0
      %589 = vadd.xlane.f32.xlu0 %v588
      %v590 = vpop.xlane.xlu0 %589
      %v591 = vsel %vm130, %v581, 0.0
      %592 = vadd.xlane.f32.xlu0 %v591
      %v593 = vpop.xlane.xlu0 %592
      %v594 = vadd.f32 %v584, %v587
      %v595 = vadd.f32 %v594, %v590
      %v596 = vadd.f32 %v595, %v593
      %v597 = vrot.slane %v596, 4
      %v598 = vadd.f32 %v596, %v597
      %v599 = vrot.slane %v598, 2
      %v600 = vadd.f32 %v598, %v599
      %v601 = vrot.slane %v600, 1
      %v602 = vadd.f32 %v600, %v601
      %v603 = vmul.f32 %v602, 0.5
      %vm604 = vcmask 0
      %605 = vst.msk [vmem:[#allocation11] sm:$0x1] %vm604, %v603
    $region41: #{tpu_custom_call.1} parent=1 // pred_fallthru
      _
    // Predicated region
    $region42: #{tpu_custom_call.1} parent=1 // pred_check
      _
    $region43: #{tpu_custom_call.1} parent=1 // pred_check_branch
      %607 = sbr.rel (0) target = $region45
    $region44: #{tpu_custom_call.1} parent=1 // pred_region
      %s609 = ssub.s32 16, 16
      %610 = vsyncadd [#allocation5], %s609
      %s612 = sshll.u32 [#allocation11], 4
      %s613 = int_to_ptr.vmem [resolvable:$true] %s612
      %615 = dma.vmem_to_hbm [thread:$0]  %s613, 16, %s4, [#allocation5]
    $region45: #{tpu_custom_call.1} parent=1 // pred_fallthru
      _
    // Predicated region
    $region46: #{tpu_custom_call.1} parent=1 // pred_check
      _
    $region47: #{tpu_custom_call.1} parent=1 // pred_check_branch
      %617 = sbr.rel (0) target = $region49
    $region48: #{tpu_custom_call.1} parent=1 // pred_region
      %618 = dma.done [#allocation5], 16
    $region49: #{tpu_custom_call.1} parent=1 // pred_fallthru
      _
    %619 = vsyncpa [#allocation4], 1
    %620 = vsyncpa [#allocation7], 1
    %621 = vsyncpa [#allocation10], 1
    %622 = vsyncpa [#allocation5], 1

</llo_original>
